<compile_context>
chip_gen: v7x
topology: tpu7x:2x2x1
jax: 0.10.0
libtpu: 0.0.40
codegen_flags: <defaults>
</compile_context>

<pallas_src>
import functools
from typing import List, Optional

import jax
import jax.numpy as jnp
from jax.experimental import pallas as pl
from jax.experimental.pallas import tpu as pltpu

_LANE = 128        # last-dim multiple (lane width)
_SUBLANE = 8       # second-to-last-dim multiple (f32 sublanes)
_MAX_TILE_ROWS = 512   # hard cap on batch-tile rows (VMEM budget may lower it)


def _round_up(n: int, m: int) -> int:
    return ((n + m - 1) // m) * m


def _vmem_capacity_bytes() -> int:
    """Physical VMEM per TensorCore; conservative 64 MiB (v7x) fallback."""
    try:
        info = pltpu.get_tpu_info()
        for name in ("vmem_capacity_bytes", "vmem_size_bytes", "vmem_bytes"):
            v = getattr(info, name, None)
            if isinstance(v, int) and v > 0:
                return v
    except Exception:
        pass
    return 64 << 20


def _num_tensorcores() -> int:
    """TensorCores per chip (2 on v7x); fallback 1 (correct for v5e/v6e)."""
    try:
        info = pltpu.get_tpu_info()
        for name in ("num_cores", "core_count", "num_tensorcores",
                     "tensorcores_per_chip", "cores_per_chip"):
            v = getattr(info, name, None)
            if isinstance(v, int) and 1 <= v <= 8:
                return v
    except Exception:
        pass
    try:
        v = getattr(jax.devices()[0], "num_cores", None)
        if isinstance(v, int) and 1 <= v <= 8:
            return v
    except Exception:
        pass
    return 1


def _probe_copy_kernel(x_ref, o_ref):
    o_ref[...] = x_ref[...]


@functools.lru_cache(maxsize=1)
def _single_buffer_supported() -> bool:
    """Probe whether pipeline_mode=pl.Buffered(1) lowers/runs on this backend."""
    if not hasattr(pl, "Buffered"):
        return False
    try:
        fn = pl.pallas_call(
            _probe_copy_kernel,
            out_shape=jax.ShapeDtypeStruct((_SUBLANE, _LANE), jnp.float32),
            grid=(2,),
            in_specs=[pl.BlockSpec((_SUBLANE, _LANE), lambda i: (0, 0),
                                   pipeline_mode=pl.Buffered(1))],
            out_specs=pl.BlockSpec((_SUBLANE, _LANE), lambda i: (0, 0)),
        )
        jax.block_until_ready(fn(jnp.zeros((_SUBLANE, _LANE), jnp.float32)))
        return True
    except Exception:
        return False


def _mlp_chunk_kernel(*refs, acts, compute_dtype):
    """A chunk of consecutive layers on one batch tile, fully VMEM/vreg-resident.

    refs = (x_ref, w0_ref, b0_ref, w1_ref, b1_ref, ..., o_ref)
    acts[l] is the activation name after layer l of the chunk, or None (final layer).
    The MXU accumulates in f32; bias add + activation are f32 regardless of param dtype
    (v5e has no bf16 VPU/EUP).  The inter-layer activation is kept in `compute_dtype`
    (param dtype) so bf16 halves the live intermediate feeding the next matmul.
    """
    x_ref = refs[0]
    o_ref = refs[-1]
    n = len(acts)
    h = x_ref[...].astype(compute_dtype)
    for l in range(n):
        w = refs[1 + 2 * l][...]
        b = refs[2 + 2 * l][...]
        y = jnp.dot(h, w, preferred_element_type=jnp.float32)
        y = y + b.astype(jnp.float32)
        a = acts[l]
        if a == "relu":
            y = jnp.maximum(y, 0.0)
        elif a == "tanh":
            y = jnp.tanh(y)
        elif a == "sigmoid":
            y = jax.nn.sigmoid(y)
        elif a is not None:
            raise ValueError("Invalid activation function")
        if l + 1 < n:
            h = y.astype(compute_dtype)
        else:
            o_ref[...] = y.astype(o_ref.dtype)


class MLPClassifierPallas:
    """JAX/Pallas re-implementation of the PyTorch MLPClassifier forward pass.

    param_dtype=jnp.bfloat16 is recommended on v5e AND v6e/v7x (bf16-native MXU,
    halves weight DMA); accumulation/bias/activation always stay f32.  bf16 params
    change numerics vs an f32 PyTorch reference (expect ~1e-2 tolerance).
    Dropout is inference-only (identity); hidden_layers entries equal to 0 are
    skipped, matching the PyTorch module.
    """

    def __init__(
        self,
        input_size: int,
        output_size: int,
        hidden_layers: List[int],
        activation: str = "tanh",
        dropout: float = 0.0,
        key: Optional[jax.Array] = None,
        param_dtype=jnp.float32,
        out_dtype=None,            # defaults to param_dtype (bf16 out on v6e/v7x if bf16 params)
    ):
        if input_size <= 0:
            raise ValueError("Invalid input size")
        if output_size <= 0:
            raise ValueError("Invalid output size")
        if len(hidden_layers) == 0:
            raise ValueError("Invalid hidden layers")
        if activation not in ["relu", "tanh", "sigmoid"]:
            raise ValueError("Invalid activation function")
        if dropout < 0 or dropout > 1:
            raise ValueError("Invalid dropout rate")

        self.activation = activation
        self.dropout = dropout
        # TODO(synk): training-mode random dropout (nn.Dropout) is not implemented;
        # forward uses inference semantics (identity), matching model.eval().
        self.input_size = input_size
        self.output_size = output_size
        self.param_dtype = jnp.dtype(param_dtype)
        self.out_dtype = jnp.dtype(out_dtype) if out_dtype is not None else self.param_dtype

        if key is None:
            key = jax.random.PRNGKey(0)

        sizes = [h for h in hidden_layers if h != 0] + [output_size]
        self.logical_dims = [input_size] + sizes
        self.padded_dims = [_round_up(d, _LANE) for d in self.logical_dims]

        # Parameters are stored PADDED once at init:
        #   W: (Fin_pad, Fout_pad), zero outside the logical (Fin, Fout) block
        #   b: (1, Fout_pad),       zero outside the logical Fout prefix
        # Zero weight rows at padded input indices guarantee padded activation lanes
        # (e.g. sigmoid(0)=0.5) contribute nothing downstream.
        self.params = []
        prev_logical = input_size
        prev_pad = self.padded_dims[0]
        for idx, h in enumerate(sizes):
            h_pad = self.padded_dims[idx + 1]
            key, kw, kb = jax.random.split(key, 3)
            # Mimic torch.nn.Linear default init: uniform(+/- 1/sqrt(fan_in)).
            bound = 1.0 / float(prev_logical) ** 0.5
            W = jax.random.uniform(kw, (prev_logical, h), jnp.float32, -bound, bound)
            b = jax.random.uniform(kb, (h,), jnp.float32, -bound, bound)
            W_pad = (
                jnp.zeros((prev_pad, h_pad), self.param_dtype)
                .at[:prev_logical, :h]
                .set(W.astype(self.param_dtype))
            )
            b_pad = (
                jnp.zeros((1, h_pad), self.param_dtype)
                .at[0, :h]
                .set(b.astype(self.param_dtype))
            )
            self.params.append((W_pad, b_pad))
            prev_logical, prev_pad = h, h_pad

        # ---- VMEM-capacity-aware planning (done once) ----
        capacity = _vmem_capacity_bytes()
        self._vmem_capacity = capacity
        self._num_tc = _num_tensorcores()

        # Capacity guard: greedily group layers into chunks whose resident params fit
        # ~35% of VMEM (leaves room for the double-buffer fallback + x/out tiles).
        budget = max(1, int(0.35 * capacity))
        chunks = []
        cur_lo, cur_bytes = 0, 0
        for l, (W, b) in enumerate(self.params):
            nb = int(W.nbytes) + int(b.nbytes)
            if l > cur_lo and cur_bytes + nb > budget:
                chunks.append((cur_lo, l))
                cur_lo, cur_bytes = l, 0
            cur_bytes += nb
        chunks.append((cur_lo, len(self.params)))
        self._chunks = chunks
        # TODO(synk): a single layer wider than the budget would need an inner
        # pltpu.emit_pipeline over its K/N dims; not implemented (it stays fully resident).

        def chunk_param_bytes(lo, hi):
            return sum(int(W.nbytes) + int(b.nbytes) for (W, b) in self.params[lo:hi])

        self._resident_max = max(chunk_param_bytes(lo, hi) for lo, hi in chunks)
        # Conservative per-batch-row VMEM traffic: double-buffered x/out tiles (f32)
        # plus f32 intermediate-activation slack.
        self._io_bytes_per_row = max(
            2 * 4 * self.padded_dims[lo] + 2 * 4 * self.padded_dims[hi]
            for lo, hi in chunks
        )
        self._act_bytes_per_row = 2 * 4 * max(self.padded_dims)

        avail = int(0.80 * capacity) - 2 * self._resident_max - (8 << 20)
        per_row = self._io_bytes_per_row + self._act_bytes_per_row
        if avail > per_row * _SUBLANE:
            max_rows = (avail // per_row) // _SUBLANE * _SUBLANE
        else:
            max_rows = _SUBLANE
        self._tile_cap = max(_SUBLANE, min(_MAX_TILE_ROWS, int(max_rows)))

    # ---- per-call helpers ----

    def _choose_batch_tiling(self, B: int):
        """Tile rows TB and padded batch B_pad.

        Pads the batch only to the next multiple of 8 per tile (over-padding bounded by
        ~8 rows per tile, not a full TB), and produces at least num_tensorcores grid
        steps when possible so v7x's two TCs both get work.
        """
        B8 = _round_up(B, _SUBLANE)
        min_tiles = max(1, min(self._num_tc, B8 // _SUBLANE))
        n = max(min_tiles, pl.cdiv(B8, self._tile_cap))
        TB = _round_up(pl.cdiv(B8, n), _SUBLANE)
        n = pl.cdiv(B8, TB)
        return TB, n * TB

    def _vmem_limit_bytes(self, TB: int) -> int:
        need = (
            2 * self._resident_max
            + TB * (self._io_bytes_per_row + self._act_bytes_per_row)
            + (16 << 20)  # headroom for compiler-internal scratch
        )
        return int(min(max(need, 32 << 20), int(0.92 * self._vmem_capacity)))

    def _run_chunk(self, h, lo, hi, B, TB, B_pad, out_dtype, vmem_limit, single_buf):
        pd = self.padded_dims
        ld = self.logical_dims
        n_layers = len(self.params)
        in_dim, out_dim = pd[lo], pd[hi]

        acts = tuple(
            self.activation if l < n_layers - 1 else None for l in range(lo, hi)
        )

        inputs = [h]
        in_specs = [pl.BlockSpec((TB, in_dim), lambda i: (i, 0))]
        # Resident weights/biases: constant (0,0) block every grid step -> single-buffer
        # them (pl.Buffered(1)) when supported so they cost 1x, not 2x, VMEM.
        w_kwargs = {"pipeline_mode": pl.Buffered(1)} if single_buf else {}
        for l in range(lo, hi):
            W, b = self.params[l]
            inputs.append(W)
            inputs.append(b)
            in_specs.append(pl.BlockSpec(W.shape, lambda i: (0, 0), **w_kwargs))
            in_specs.append(pl.BlockSpec(b.shape, lambda i: (0, 0), **w_kwargs))
        out_specs = pl.BlockSpec((TB, out_dim), lambda i: (i, 0))

        kernel = functools.partial(
            _mlp_chunk_kernel, acts=acts, compute_dtype=self.param_dtype
        )

        # Advisory cost estimate on LOGICAL (unpadded) dims.
        flops = sum(2 * B * ld[l] * ld[l + 1] for l in range(lo, hi))
        transcendentals = 0
        if self.activation != "relu":
            transcendentals = B * sum(
                ld[l + 1] for l in range(lo, hi) if l < n_layers - 1
            )
        param_bytes = sum(
            int(W.nbytes) + int(b.nbytes) for (W, b) in self.params[lo:hi]
        )
        bytes_accessed = (
            int(h.size) * h.dtype.itemsize
            + param_bytes
            + B_pad * out_dim * jnp.dtype(out_dtype).itemsize
        )
        cost = pl.CostEstimate(
            flops=int(flops),
            transcendentals=int(transcendentals),
            bytes_accessed=int(bytes_accessed),
        )

        return pl.pallas_call(
            kernel,
            out_shape=jax.ShapeDtypeStruct((B_pad, out_dim), out_dtype),
            grid=(B_pad // TB,),
            in_specs=in_specs,
            out_specs=out_specs,
            compiler_params=pltpu.CompilerParams(
                dimension_semantics=("parallel",),
                vmem_limit_bytes=vmem_limit,
            ),
            cost_estimate=cost,
        )(*inputs)

    def __call__(self, x: jax.Array) -> jax.Array:
        B, F = x.shape
        if F != self.input_size:
            raise ValueError("Input feature dim mismatch")

        TB, B_pad = self._choose_batch_tiling(B)
        pd0 = self.padded_dims[0]

        # Fast path: skip the wrapper-side padding copy when already (8,128)-aligned
        # (the kernel casts to param dtype on-chip, so no dtype copy needed either).
        if B_pad == B and pd0 == F:
            h = x
        else:
            h = jnp.pad(x, ((0, B_pad - B), (0, pd0 - F)))

        vmem_limit = self._vmem_limit_bytes(TB)
        single_buf = _single_buffer_supported()
        n_layers = len(self.params)
        for (lo, hi) in self._chunks:
            out_dtype = self.out_dtype if hi == n_layers else self.param_dtype
            h = self._run_chunk(h, lo, hi, B, TB, B_pad, out_dtype, vmem_limit, single_buf)

        # Slice off batch padding and lane padding -> logical result.
        return h[:B, : self.output_size]


if __name__ == "__main__":
    key = jax.random.PRNGKey(0)
    key, kx = jax.random.split(key)

    batch = 8
    input_size = 16
    hidden_layers = [32, 32]
    output_size = 4

    x = jax.random.normal(kx, (batch, input_size), dtype=jnp.float32)

    model = MLPClassifierPallas(
        input_size=input_size,
        output_size=output_size,
        hidden_layers=hidden_layers,
        activation="tanh",
        dropout=0.0,
        key=key,
    )

    out = jax.block_until_ready(model(x))

    # Plain-JAX reference of the same math using the logical (unpadded) params.
    dims = model.logical_dims
    ref = x
    for li, (W_pad, b_pad) in enumerate(model.params):
        din, dout = dims[li], dims[li + 1]
        W = W_pad[:din, :dout].astype(jnp.float32)
        b = b_pad[0, :dout].astype(jnp.float32)
        ref = ref @ W + b
        if li < len(model.params) - 1:
            ref = jnp.tanh(ref)

    assert out.shape == (batch, output_size)
    assert jnp.allclose(out.astype(jnp.float32), ref, atol=1e-5, rtol=1e-5)

    print("KERNEL_OK")
</pallas_src>

<mosaic_0001>
module attributes {stable_mosaic.version = 11 : i64} {
  func.func @_probe_copy_kernel(%arg0: i32, %arg1: memref<8x128xf32, #tpu.memory_space<vmem>>, %arg2: memref<8x128xf32, #tpu.memory_space<vmem>>) attributes {dimension_semantics = [#tpu.dimension_semantics<arbitrary>], iteration_bounds = array<i64: 2>, scalar_prefetch = 0 : i64, scratch_operands = 0 : i64, tpu.core_type = #tpu.core_type<tc>, window_params = [{pipeline_mode = #tpu.pipeline_mode<synchronous>, transform_indices = @transform_0, window_bounds = array<i64: 8, 128>}, {pipeline_mode = #tpu.pipeline_mode<synchronous>, transform_indices = @transform_1, window_bounds = array<i64: 8, 128>}]} {
    %c0 = arith.constant 0 : index
    %c0_0 = arith.constant 0 : index
    %0 = vector.load %arg1[%c0, %c0_0] : memref<8x128xf32, #tpu.memory_space<vmem>>, vector<8x128xf32>
    %c0_1 = arith.constant 0 : index
    %c0_2 = arith.constant 0 : index
    %1 = vector.load %arg2[%c0_1, %c0_2] : memref<8x128xf32, #tpu.memory_space<vmem>>, vector<8x128xf32>
    tpu.vector_store %arg2[%c0_1, %c0_2], %0 {strides = array<i32>} : memref<8x128xf32, #tpu.memory_space<vmem>>, vector<8x128xf32>,
    return
  }
  func.func @transform_0(%arg0: i32) -> (i32, i32) {
    %c0_i32 = arith.constant 0 : i32
    %c0_i32_0 = arith.constant 0 : i32
    %c0_i32_1 = arith.constant 0 : i32
    return %c0_i32, %c0_i32_0 : i32, i32
  }
  func.func @transform_1(%arg0: i32) -> (i32, i32) {
    %c0_i32 = arith.constant 0 : i32
    %c0_i32_0 = arith.constant 0 : i32
    %c0_i32_1 = arith.constant 0 : i32
    return %c0_i32, %c0_i32_0 : i32, i32
  }
}

module attributes {stable_mosaic.version = 11 : i64} {
  func.func @_mlp_chunk_kernel(%arg0: i32, %arg1: memref<8x128xf32, #tpu.memory_space<vmem>>, %arg2: memref<128x128xf32, #tpu.memory_space<vmem>>, %arg3: memref<1x128xf32, #tpu.memory_space<vmem>>, %arg4: memref<128x128xf32, #tpu.memory_space<vmem>>, %arg5: memref<1x128xf32, #tpu.memory_space<vmem>>, %arg6: memref<128x128xf32, #tpu.memory_space<vmem>>, %arg7: memref<1x128xf32, #tpu.memory_space<vmem>>, %arg8: memref<8x128xf32, #tpu.memory_space<vmem>>) attributes {dimension_semantics = [#tpu.dimension_semantics<parallel>], iteration_bounds = array<i64: 1>, scalar_prefetch = 0 : i64, scratch_operands = 0 : i64, tpu.core_type = #tpu.core_type<tc>, window_params = [{transform_indices = @transform_0, window_bounds = array<i64: 8, 128>}, {pipeline_mode = #tpu.pipeline_mode<synchronous>, transform_indices = @transform_1, window_bounds = array<i64: 128, 128>}, {pipeline_mode = #tpu.pipeline_mode<synchronous>, transform_indices = @transform_2, window_bounds = array<i64: 1, 128>}, {pipeline_mode = #tpu.pipeline_mode<synchronous>, transform_indices = @transform_3, window_bounds = array<i64: 128, 128>}, {pipeline_mode = #tpu.pipeline_mode<synchronous>, transform_indices = @transform_4, window_bounds = array<i64: 1, 128>}, {pipeline_mode = #tpu.pipeline_mode<synchronous>, transform_indices = @transform_5, window_bounds = array<i64: 128, 128>}, {pipeline_mode = #tpu.pipeline_mode<synchronous>, transform_indices = @transform_6, window_bounds = array<i64: 1, 128>}, {transform_indices = @transform_7, window_bounds = array<i64: 8, 128>}]} {
    %c0 = arith.constant 0 : index
    %c0_0 = arith.constant 0 : index
    %0 = vector.load %arg1[%c0, %c0_0] : memref<8x128xf32, #tpu.memory_space<vmem>>, vector<8x128xf32>
    %c0_1 = arith.constant 0 : index
    %c0_2 = arith.constant 0 : index
    %1 = vector.load %arg2[%c0_1, %c0_2] : memref<128x128xf32, #tpu.memory_space<vmem>>, vector<128x128xf32>
    %c0_3 = arith.constant 0 : index
    %c0_4 = arith.constant 0 : index
    %2 = vector.load %arg3[%c0_3, %c0_4] : memref<1x128xf32, #tpu.memory_space<vmem>>, vector<1x128xf32>
    %cst = arith.constant dense<0.000000e+00> : vector<8x128xf32>
    %3 = tpu.matmul %0, %1, %cst {dimension_numbers = #tpu.dot_dimension_numbers<[1], [0], [0], [1], [0, 0, 1, 1], [], []>} : vector<8x128xf32>, vector<128x128xf32>, vector<8x128xf32> -> vector<8x128xf32>
    %4 = vector.broadcast %2 : vector<1x128xf32> to vector<8x128xf32>
    %5 = arith.addf %3, %4 : vector<8x128xf32>
    %6 = math.tanh %5 : vector<8x128xf32>
    %c0_5 = arith.constant 0 : index
    %c0_6 = arith.constant 0 : index
    %7 = vector.load %arg4[%c0_5, %c0_6] : memref<128x128xf32, #tpu.memory_space<vmem>>, vector<128x128xf32>
    %c0_7 = arith.constant 0 : index
    %c0_8 = arith.constant 0 : index
    %8 = vector.load %arg5[%c0_7, %c0_8] : memref<1x128xf32, #tpu.memory_space<vmem>>, vector<1x128xf32>
    %cst_9 = arith.constant dense<0.000000e+00> : vector<8x128xf32>
    %9 = tpu.matmul %6, %7, %cst_9 {dimension_numbers = #tpu.dot_dimension_numbers<[1], [0], [0], [1], [0, 0, 1, 1], [], []>} : vector<8x128xf32>, vector<128x128xf32>, vector<8x128xf32> -> vector<8x128xf32>
    %10 = vector.broadcast %8 : vector<1x128xf32> to vector<8x128xf32>
    %11 = arith.addf %9, %10 : vector<8x128xf32>
    %12 = math.tanh %11 : vector<8x128xf32>
    %c0_10 = arith.constant 0 : index
    %c0_11 = arith.constant 0 : index
    %13 = vector.load %arg6[%c0_10, %c0_11] : memref<128x128xf32, #tpu.memory_space<vmem>>, vector<128x128xf32>
    %c0_12 = arith.constant 0 : index
    %c0_13 = arith.constant 0 : index
    %14 = vector.load %arg7[%c0_12, %c0_13] : memref<1x128xf32, #tpu.memory_space<vmem>>, vector<1x128xf32>
    %cst_14 = arith.constant dense<0.000000e+00> : vector<8x128xf32>
    %15 = tpu.matmul %12, %13, %cst_14 {dimension_numbers = #tpu.dot_dimension_numbers<[1], [0], [0], [1], [0, 0, 1, 1], [], []>} : vector<8x128xf32>, vector<128x128xf32>, vector<8x128xf32> -> vector<8x128xf32>
    %16 = vector.broadcast %14 : vector<1x128xf32> to vector<8x128xf32>
    %17 = arith.addf %15, %16 : vector<8x128xf32>
    %c0_15 = arith.constant 0 : index
    %c0_16 = arith.constant 0 : index
    %18 = vector.load %arg8[%c0_15, %c0_16] : memref<8x128xf32, #tpu.memory_space<vmem>>, vector<8x128xf32>
    tpu.vector_store %arg8[%c0_15, %c0_16], %17 {strides = array<i32>} : memref<8x128xf32, #tpu.memory_space<vmem>>, vector<8x128xf32>,
    return
  }
  func.func @transform_0(%arg0: i32) -> (i32, i32) {
    %c0_i32 = arith.constant 0 : i32
    %c0_i32_0 = arith.constant 0 : i32
    return %arg0, %c0_i32 : i32, i32
  }
  func.func @transform_1(%arg0: i32) -> (i32, i32) {
    %c0_i32 = arith.constant 0 : i32
    %c0_i32_0 = arith.constant 0 : i32
    %c0_i32_1 = arith.constant 0 : i32
    return %c0_i32, %c0_i32_0 : i32, i32
  }
  func.func @transform_2(%arg0: i32) -> (i32, i32) {
    %c0_i32 = arith.constant 0 : i32
    %c0_i32_0 = arith.constant 0 : i32
    %c0_i32_1 = arith.constant 0 : i32
    return %c0_i32, %c0_i32_0 : i32, i32
  }
  func.func @transform_3(%arg0: i32) -> (i32, i32) {
    %c0_i32 = arith.constant 0 : i32
    %c0_i32_0 = arith.constant 0 : i32
    %c0_i32_1 = arith.constant 0 : i32
    return %c0_i32, %c0_i32_0 : i32, i32
  }
  func.func @transform_4(%arg0: i32) -> (i32, i32) {
    %c0_i32 = arith.constant 0 : i32
    %c0_i32_0 = arith.constant 0 : i32
    %c0_i32_1 = arith.constant 0 : i32
    return %c0_i32, %c0_i32_0 : i32, i32
  }
  func.func @transform_5(%arg0: i32) -> (i32, i32) {
    %c0_i32 = arith.constant 0 : i32
    %c0_i32_0 = arith.constant 0 : i32
    %c0_i32_1 = arith.constant 0 : i32
    return %c0_i32, %c0_i32_0 : i32, i32
  }
  func.func @transform_6(%arg0: i32) -> (i32, i32) {
    %c0_i32 = arith.constant 0 : i32
    %c0_i32_0 = arith.constant 0 : i32
    %c0_i32_1 = arith.constant 0 : i32
    return %c0_i32, %c0_i32_0 : i32, i32
  }
  func.func @transform_7(%arg0: i32) -> (i32, i32) {
    %c0_i32 = arith.constant 0 : i32
    %c0_i32_0 = arith.constant 0 : i32
    return %arg0, %c0_i32 : i32, i32
  }
}

</mosaic_0001>

<llo_original>
// kernel: tpu_custom_call.1
$region0: #{tpu_custom_call.1}
  #allocation0 [shape = 'u32[]', space=smem, size = 0x4, offset = 0x4, fixed_abs, tag = 'smem constant byte address 0x4 - core index']
  #allocation1 [shape = 'u32[144,128]{1,0:T(1,128)}', space=vmem, size = 0x12000, scoped, tag = 'internal scratch']
  %s0 = inlined_call_operand.hbm [shape: f32[8,128], index: 0, kind: input, shape index: {}]
  %s1 = inlined_call_operand.hbm [shape: f32[8,128], index: 1, kind: output, shape index: {}]
  %s2 = sld [smem:[#allocation0]]
  $region41: #{tpu_custom_call.1} parent=0
    _
  %s4 = ssub.s32 1, %s2
  %s5 = scalar_select 0, %s4, %s2
  $region1: #{tpu_custom_call.1} parent=0
    #allocation2 [shape = 'u8[4096]{0}', space=vmem, size = 0x1000, scoped, tag = 'input window, operand 0, single buffered']
    #allocation3 [shape = 's32[2]{0}', space=sflag, size = 0x8, scoped, tag = 'scoped memory for tpu_custom_call.1']
    #allocation4 [shape = 's32[2]{0}', space=sflag, size = 0x8, scoped, tag = 'scoped memory for tpu_custom_call.1']
    #allocation5 [shape = 'u8[4096]{0}', space=vmem, size = 0x1000, scoped, tag = 'output window, operand 0, single buffered']
    %6 = vsyncpa [#allocation3], 0
    %7 = vsyncpa [#allocation4], 0
    loop: start=0, step=1, limit=4
    $region2: #{tpu_custom_call.1} parent=1 // loop_pre_header
      _
    $region3: #{tpu_custom_call.1} parent=1 // loop_header
      %s9 = sphi 0, %s13
      %p10 = scmp.ge.s32.totalorder %s9, 4
      %s17 = sphi 0, %s17
      %s19 = sphi 0, %s17
      %s20 = sphi 0, %s19
      %s34 = sphi 0, %s20
      %s38 = sphi 0, %s38
      %s40 = sphi 0, %s38
      %s41 = sphi 0, %s40
      %s55 = sphi 0, %s41
    $region4: #{tpu_custom_call.1} parent=1 // loop_header_branch
      %12 = sbr.rel (%p10) target = $region8
    $region5: #{tpu_custom_call.1} parent=1 // loop_body
      %s14 = ssub.s32 %s9, 1
      %s15 = ssub.s32 %s9, 2
      %s16 = sadd.s32 %s9, 1
      %s18 = sadd.s32 %s17, 1
      %p21 = scmp.eq.s32.totalorder %s9, 1
      %p22 = scmp.ne.s32.totalorder %s17, %s19
      %p23 = scmp.eq.s32.totalorder %s9, 0
      %p24 = por %p22, %p23
      %p25 = scmp.ne.s32.totalorder %s17, %s19
      %p26 = scmp.eq.s32.totalorder %s14, 1
      %p27 = por %p25, %p26
      %p28 = scmp.ne.s32.totalorder %s19, %s20
      %p29 = scmp.eq.s32.totalorder %s14, 0
      %p30 = por %p28, %p29
      %p31 = scmp.ne.s32.totalorder %s19, %s20
      %p32 = scmp.eq.s32.totalorder %s15, 1
      %p33 = por %p31, %p32
      %p35 = scmp.ne.s32.totalorder %s20, %s34
      %p36 = scmp.eq.s32.totalorder %s15, 0
      %p37 = por %p35, %p36
      %s39 = sadd.s32 %s38, 1
      %p42 = scmp.eq.s32.totalorder %s9, 1
      %p43 = scmp.ne.s32.totalorder %s38, %s40
      %p44 = scmp.eq.s32.totalorder %s9, 0
      %p45 = por %p43, %p44
      %p46 = scmp.ne.s32.totalorder %s38, %s40
      %p47 = scmp.eq.s32.totalorder %s14, 1
      %p48 = por %p46, %p47
      %p49 = scmp.ne.s32.totalorder %s40, %s41
      %p50 = scmp.eq.s32.totalorder %s14, 0
      %p51 = por %p49, %p50
      %p52 = scmp.ne.s32.totalorder %s40, %s41
      %p53 = scmp.eq.s32.totalorder %s15, 1
      %p54 = por %p52, %p53
      %p56 = scmp.ne.s32.totalorder %s41, %s55
      %p57 = scmp.eq.s32.totalorder %s15, 0
      %p58 = por %p56, %p57
      %p59 = scmp.le.s32.totalorder 1, %s9
      %p60 = scmp.lt.s32.totalorder %s9, 3
      %p61 = pnand %p59, %p60
      %p62 = pneg %p61
      // Predicated region
      $region9: #{tpu_custom_call.1} parent=5 // pred_check
        _
      $region10: #{tpu_custom_call.1} parent=5 // pred_check_branch
        %64 = sbr.rel (%p61) target = $region12
      $region11: #{tpu_custom_call.1} parent=5 // pred_region
        %s65 = ssub.s32 %s9, 1
        // Predicated region
        $region13: #{tpu_custom_call.1} parent=11 // pred_check
          %p66 = pneg %p30
        $region14: #{tpu_custom_call.1} parent=11 // pred_check_branch
          %68 = sbr.rel (%p66) target = $region16
        $region15: #{tpu_custom_call.1} parent=11 // pred_region
          %s70 = ssub.s32 128, 128
          %71 = vsyncadd [#allocation3], %s70
          %s73 = sshll.u32 [#allocation2], 4
          %s74 = int_to_ptr.vmem [resolvable:$true] %s73
          %76 = dma.hbm_to_vmem [thread:$0]  %s0, 128, %s74, [#allocation3]
        $region16: #{tpu_custom_call.1} parent=11 // pred_fallthru
          _
      $region12: #{tpu_custom_call.1} parent=5 // pred_fallthru
        _
      %p77 = scmp.lt.s32.totalorder %s9, 2
      // Predicated region
      $region17: #{tpu_custom_call.1} parent=5 // pred_check
        %p78 = pneg %p77
      $region18: #{tpu_custom_call.1} parent=5 // pred_check_branch
        %80 = sbr.rel (%p78) target = $region20
      $region19: #{tpu_custom_call.1} parent=5 // pred_region
        _
      $region20: #{tpu_custom_call.1} parent=5 // pred_fallthru
        _
      %p81 = scmp.le.s32.totalorder 1, %s9
      %p82 = scmp.lt.s32.totalorder %s9, 3
      %p83 = pnand %p81, %p82
      %p84 = pneg %p83
      // Predicated region
      $region21: #{tpu_custom_call.1} parent=5 // pred_check
        _
      $region22: #{tpu_custom_call.1} parent=5 // pred_check_branch
        %86 = sbr.rel (%p83) target = $region24
      $region23: #{tpu_custom_call.1} parent=5 // pred_region
        %s87 = ssub.s32 %s9, 1
        // Predicated region
        $region25: #{tpu_custom_call.1} parent=23 // pred_check
          %p88 = pneg %p30
        $region26: #{tpu_custom_call.1} parent=23 // pred_check_branch
          %90 = sbr.rel (%p88) target = $region28
        $region27: #{tpu_custom_call.1} parent=23 // pred_region
          %91 = dma.done [#allocation3], 128
        $region28: #{tpu_custom_call.1} parent=23 // pred_fallthru
          _
        %p92 = pneg %p30
        %p93 = pneg %p27
        %p94 = pneg %p51
        %p95 = pneg %p48
        %v96 = vld [vmem:[#allocation2] sm:$0xff]
        %97 = vst [vmem:[#allocation5] sm:$0xff] %v96
        // Predicated region
        $region29: #{tpu_custom_call.1} parent=23 // pred_check
          %p98 = pneg %p48
        $region30: #{tpu_custom_call.1} parent=23 // pred_check_branch
          %100 = sbr.rel (%p98) target = $region32
        $region31: #{tpu_custom_call.1} parent=23 // pred_region
          %s102 = ssub.s32 128, 128
          %103 = vsyncadd [#allocation4], %s102
          %s105 = sshll.u32 [#allocation5], 4
          %s106 = int_to_ptr.vmem [resolvable:$true] %s105
          %108 = dma.vmem_to_hbm [thread:$0]  %s106, 128, %s1, [#allocation4]
        $region32: #{tpu_custom_call.1} parent=23 // pred_fallthru
          _
        // Predicated region
        $region33: #{tpu_custom_call.1} parent=23 // pred_check
          %p109 = pneg %p48
        $region34: #{tpu_custom_call.1} parent=23 // pred_check_branch
          %111 = sbr.rel (%p109) target = $region36
        $region35: #{tpu_custom_call.1} parent=23 // pred_region
          %112 = dma.done [#allocation4], 128
        $region36: #{tpu_custom_call.1} parent=23 // pred_fallthru
          _
      $region24: #{tpu_custom_call.1} parent=5 // pred_fallthru
        _
      %p113 = scmp.le.s32.totalorder 2, %s9
      // Predicated region
      $region37: #{tpu_custom_call.1} parent=5 // pred_check
        %p114 = pneg %p113
      $region38: #{tpu_custom_call.1} parent=5 // pred_check_branch
        %116 = sbr.rel (%p114) target = $region40
      $region39: #{tpu_custom_call.1} parent=5 // pred_region
        %s117 = ssub.s32 %s9, 2
      $region40: #{tpu_custom_call.1} parent=5 // pred_fallthru
        _
    $region6: #{tpu_custom_call.1} parent=1 // loop_footer
      %s13 = sadd.s32 1, %s9
    $region7: #{tpu_custom_call.1} parent=1 // loop_footer_branch
      %8 = sbr.rel target = $region3
    $region8: #{tpu_custom_call.1} parent=1 // loop_exit
      _
    %118 = vsyncpa [#allocation3], 1
    %s119 = scalar_lea.sflag [#allocation3], 1
    %120 = vsyncpa %s119, 1
    %121 = vsyncpa [#allocation4], 1
    %s122 = scalar_lea.sflag [#allocation4], 1
    %123 = vsyncpa %s122, 1

// kernel: tpu_custom_call.1
$region0: #{tpu_custom_call.1}
  #allocation0 [shape = 'u32[]', space=smem, size = 0x4, offset = 0x4, fixed_abs, tag = 'smem constant byte address 0x4 - core index']
  #allocation1 [shape = 'u32[144,128]{1,0:T(1,128)}', space=vmem, size = 0x12000, scoped, tag = 'internal scratch']
  %s0 = inlined_call_operand.hbm [shape: f32[8,128], index: 0, kind: input, shape index: {}]
  %s1 = inlined_call_operand.hbm [shape: f32[128,128], index: 1, kind: input, shape index: {}]
  %s2 = inlined_call_operand.vmem [shape: f32[1,128], index: 2, kind: input, shape index: {}]
  %s3 = inlined_call_operand.hbm [shape: f32[128,128], index: 3, kind: input, shape index: {}]
  %s4 = inlined_call_operand.vmem [shape: f32[1,128], index: 4, kind: input, shape index: {}]
  %s5 = inlined_call_operand.hbm [shape: f32[128,128], index: 5, kind: input, shape index: {}]
  %s6 = inlined_call_operand.vmem [shape: f32[1,128], index: 6, kind: input, shape index: {}]
  %s7 = inlined_call_operand.hbm [shape: f32[8,128], index: 7, kind: output, shape index: {}]
  %s8 = sld [smem:[#allocation0]]
  $region54: #{tpu_custom_call.1} parent=0
    _
  %s10 = ssub.s32 1, %s8
  %s11 = scalar_select 0, %s10, %s8
  $region1: #{tpu_custom_call.1} parent=0
    #allocation2 [shape = 'u8[4096]{0}', space=vmem, size = 0x1000, scoped, tag = 'input window, operand 0, single buffered']
    #allocation3 [shape = 's32[1]{0}', space=sflag, size = 0x4, scoped, tag = 'scoped memory for tpu_custom_call.1']
    #allocation4 [shape = 's32[1]{0}', space=sflag, size = 0x4, scoped, tag = 'scoped memory for tpu_custom_call.1']
    #allocation5 [shape = 'u8[65536]{0}', space=vmem, size = 0x10000, scoped, tag = 'input window, operand 1, single buffered']
    #allocation6 [shape = 's32[1]{0}', space=sflag, size = 0x4, scoped, tag = 'scoped memory for tpu_custom_call.1']
    #allocation7 [shape = 'u8[65536]{0}', space=vmem, size = 0x10000, scoped, tag = 'input window, operand 3, single buffered']
    #allocation8 [shape = 'u8[65536]{0}', space=vmem, size = 0x10000, scoped, tag = 'input window, operand 5, single buffered']
    #allocation9 [shape = 's32[1]{0}', space=sflag, size = 0x4, scoped, tag = 'scoped memory for tpu_custom_call.1']
    #allocation10 [shape = 'u8[4096]{0}', space=vmem, size = 0x1000, scoped, tag = 'output window, operand 0, single buffered']
    %12 = vsyncpa [#allocation3], 0
    %13 = vsyncpa [#allocation6], 0
    %14 = vsyncpa [#allocation9], 0
    %15 = vsyncpa [#allocation4], 0
    // Predicated region
    $region2: #{tpu_custom_call.1} parent=1 // pred_check
      _
    $region3: #{tpu_custom_call.1} parent=1 // pred_check_branch
      %17 = sbr.rel (0) target = $region5
    $region4: #{tpu_custom_call.1} parent=1 // pred_region
      %s19 = ssub.s32 128, 128
      %20 = vsyncadd [#allocation3], %s19
      %s22 = sshll.u32 [#allocation2], 4
      %s23 = int_to_ptr.vmem [resolvable:$true] %s22
      %25 = dma.hbm_to_vmem [thread:$0]  %s0, 128, %s23, [#allocation3]
    $region5: #{tpu_custom_call.1} parent=1 // pred_fallthru
      _
    // Predicated region
    $region6: #{tpu_custom_call.1} parent=1 // pred_check
      _
    $region7: #{tpu_custom_call.1} parent=1 // pred_check_branch
      %27 = sbr.rel (0) target = $region9
    $region8: #{tpu_custom_call.1} parent=1 // pred_region
      %s29 = ssub.s32 2048, 2048
      %30 = vsyncadd [#allocation6], %s29
      %s31 = sshll.u32 [#allocation5], 4
      %s32 = int_to_ptr.vmem [resolvable:$true] %s31
      %37 = dma.hbm_to_vmem [thread:$0]  %s1, 2048, %s32, [#allocation6], 128, 128, 8
    $region9: #{tpu_custom_call.1} parent=1 // pred_fallthru
      _
    // Predicated region
    $region10: #{tpu_custom_call.1} parent=1 // pred_check
      _
    $region11: #{tpu_custom_call.1} parent=1 // pred_check_branch
      %39 = sbr.rel (0) target = $region13
    $region12: #{tpu_custom_call.1} parent=1 // pred_region
      _
    $region13: #{tpu_custom_call.1} parent=1 // pred_fallthru
      _
    // Predicated region
    $region14: #{tpu_custom_call.1} parent=1 // pred_check
      _
    $region15: #{tpu_custom_call.1} parent=1 // pred_check_branch
      %41 = sbr.rel (0) target = $region17
    $region16: #{tpu_custom_call.1} parent=1 // pred_region
      %s43 = ssub.s32 2048, 2048
      %44 = vsyncadd [#allocation6], %s43
      %s45 = sshll.u32 [#allocation7], 4
      %s46 = int_to_ptr.vmem [resolvable:$true] %s45
      %51 = dma.hbm_to_vmem [thread:$0]  %s3, 2048, %s46, [#allocation6], 128, 128, 8
    $region17: #{tpu_custom_call.1} parent=1 // pred_fallthru
      _
    // Predicated region
    $region18: #{tpu_custom_call.1} parent=1 // pred_check
      _
    $region19: #{tpu_custom_call.1} parent=1 // pred_check_branch
      %53 = sbr.rel (0) target = $region21
    $region20: #{tpu_custom_call.1} parent=1 // pred_region
      _
    $region21: #{tpu_custom_call.1} parent=1 // pred_fallthru
      _
    // Predicated region
    $region22: #{tpu_custom_call.1} parent=1 // pred_check
      _
    $region23: #{tpu_custom_call.1} parent=1 // pred_check_branch
      %55 = sbr.rel (0) target = $region25
    $region24: #{tpu_custom_call.1} parent=1 // pred_region
      %s57 = ssub.s32 2048, 2048
      %58 = vsyncadd [#allocation9], %s57
      %s59 = sshll.u32 [#allocation8], 4
      %s60 = int_to_ptr.vmem [resolvable:$true] %s59
      %65 = dma.hbm_to_vmem [thread:$0]  %s5, 2048, %s60, [#allocation9], 128, 128, 8
    $region25: #{tpu_custom_call.1} parent=1 // pred_fallthru
      _
    // Predicated region
    $region26: #{tpu_custom_call.1} parent=1 // pred_check
      _
    $region27: #{tpu_custom_call.1} parent=1 // pred_check_branch
      %67 = sbr.rel (0) target = $region29
    $region28: #{tpu_custom_call.1} parent=1 // pred_region
      _
    $region29: #{tpu_custom_call.1} parent=1 // pred_fallthru
      _
    // Predicated region
    $region30: #{tpu_custom_call.1} parent=1 // pred_check
      _
    $region31: #{tpu_custom_call.1} parent=1 // pred_check_branch
      %69 = sbr.rel (0) target = $region33
    $region32: #{tpu_custom_call.1} parent=1 // pred_region
      %70 = dma.done [#allocation3], 128
    $region33: #{tpu_custom_call.1} parent=1 // pred_fallthru
      _
    // Predicated region
    $region34: #{tpu_custom_call.1} parent=1 // pred_check
      _
    $region35: #{tpu_custom_call.1} parent=1 // pred_check_branch
      %72 = sbr.rel (0) target = $region37
    $region36: #{tpu_custom_call.1} parent=1 // pred_region
      %73 = dma.done [#allocation6], 2048
    $region37: #{tpu_custom_call.1} parent=1 // pred_fallthru
      _
    // Predicated region
    $region38: #{tpu_custom_call.1} parent=1 // pred_check
      _
    $region39: #{tpu_custom_call.1} parent=1 // pred_check_branch
      %75 = sbr.rel (0) target = $region41
    $region40: #{tpu_custom_call.1} parent=1 // pred_region
      %76 = dma.done [#allocation6], 2048
    $region41: #{tpu_custom_call.1} parent=1 // pred_fallthru
      _
    // Predicated region
    $region42: #{tpu_custom_call.1} parent=1 // pred_check
      _
    $region43: #{tpu_custom_call.1} parent=1 // pred_check_branch
      %78 = sbr.rel (0) target = $region45
    $region44: #{tpu_custom_call.1} parent=1 // pred_region
      %79 = dma.done [#allocation9], 2048
    $region45: #{tpu_custom_call.1} parent=1 // pred_fallthru
      _
    %v80 = vld [vmem:[#allocation2] sm:$0xff]
    %v81 = vld [vmem:[#allocation5] sm:$0xff]
    %v82 = vld [vmem:[#allocation5 + $0x8] sm:$0xff]
    %v83 = vld [vmem:[#allocation5 + $0x10] sm:$0xff]
    %v84 = vld [vmem:[#allocation5 + $0x18] sm:$0xff]
    %v85 = vld [vmem:[#allocation5 + $0x20] sm:$0xff]
    %v86 = vld [vmem:[#allocation5 + $0x28] sm:$0xff]
    %v87 = vld [vmem:[#allocation5 + $0x30] sm:$0xff]
    %v88 = vld [vmem:[#allocation5 + $0x38] sm:$0xff]
    %v89 = vld [vmem:[#allocation5 + $0x40] sm:$0xff]
    %v90 = vld [vmem:[#allocation5 + $0x48] sm:$0xff]
    %v91 = vld [vmem:[#allocation5 + $0x50] sm:$0xff]
    %v92 = vld [vmem:[#allocation5 + $0x58] sm:$0xff]
    %v93 = vld [vmem:[#allocation5 + $0x60] sm:$0xff]
    %v94 = vld [vmem:[#allocation5 + $0x68] sm:$0xff]
    %v95 = vld [vmem:[#allocation5 + $0x70] sm:$0xff]
    %v96 = vld [vmem:[#allocation5 + $0x78] sm:$0xff]
    %v97 = vld [vmem:[%s2] sm:$0x1]
    %v99 = vlaneseq
    %v100 = vshrl.u32 %v99, 7
    %v101 = vsub.s32 0, %v100
    %v102 = vrot.slane %v97, %v101
    %104 = vmatprep.subr.mxu0 0.0
    %105 = vmatpush1.msra.mxu0 %v81
    %106 = vmatprep.subr.mxu0 0.0
    %107 = vmatpush1.msra.mxu0 %v82
    %108 = vmatprep.subr.mxu0 0.0
    %109 = vmatpush1.msra.mxu0 %v83
    %110 = vmatprep.subr.mxu0 0.0
    %111 = vmatpush1.msra.mxu0 %v84
    %112 = vmatprep.subr.mxu0 0.0
    %113 = vmatpush1.msra.mxu0 %v85
    %114 = vmatprep.subr.mxu0 0.0
    %115 = vmatpush1.msra.mxu0 %v86
    %116 = vmatprep.subr.mxu0 0.0
    %117 = vmatpush1.msra.mxu0 %v87
    %118 = vmatprep.subr.mxu0 0.0
    %119 = vmatpush1.msra.mxu0 %v88
    %120 = vmatprep.subr.mxu0 0.0
    %121 = vmatpush1.msra.mxu0 %v89
    %122 = vmatprep.subr.mxu0 0.0
    %123 = vmatpush1.msra.mxu0 %v90
    %124 = vmatprep.subr.mxu0 0.0
    %125 = vmatpush1.msra.mxu0 %v91
    %126 = vmatprep.subr.mxu0 0.0
    %127 = vmatpush1.msra.mxu0 %v92
    %128 = vmatprep.subr.mxu0 0.0
    %129 = vmatpush1.msra.mxu0 %v93
    %130 = vmatprep.subr.mxu0 0.0
    %131 = vmatpush1.msra.mxu0 %v94
    %132 = vmatprep.subr.mxu0 0.0
    %133 = vmatpush1.msra.mxu0 %v95
    %134 = vmatprep.subr.mxu0 0.0
    %135 = vmatpush1.msra.mxu0 %v96
    %136 = vmatprep.subr.mxu0 0.0
    %137 = vmatpush1.msra.mxu0 0.0
    %138 = vmatprep.subr.mxu0 0.0
    %139 = vmatpush1.msra.mxu0 0.0
    %140 = vmatprep.subr.mxu0 0.0
    %141 = vmatpush1.msra.mxu0 0.0
    %142 = vmatprep.subr.mxu0 0.0
    %143 = vmatpush1.msra.mxu0 0.0
    %144 = vmatprep.subr.mxu0 0.0
    %145 = vmatpush1.msra.mxu0 0.0
    %146 = vmatprep.subr.mxu0 0.0
    %147 = vmatpush1.msra.mxu0 0.0
    %148 = vmatprep.subr.mxu0 0.0
    %149 = vmatpush1.msra.mxu0 0.0
    %150 = vmatprep.subr.mxu0 0.0
    %151 = vmatpush1.msra.mxu0 0.0
    %152 = vmatprep.subr.mxu0 0.0
    %153 = vmatpush1.msra.mxu0 0.0
    %154 = vmatprep.subr.mxu0 0.0
    %155 = vmatpush1.msra.mxu0 0.0
    %156 = vmatprep.subr.mxu0 0.0
    %157 = vmatpush1.msra.mxu0 0.0
    %158 = vmatprep.subr.mxu0 0.0
    %159 = vmatpush1.msra.mxu0 0.0
    %160 = vmatprep.subr.mxu0 0.0
    %161 = vmatpush1.msra.mxu0 0.0
    %162 = vmatprep.subr.mxu0 0.0
    %163 = vmatpush1.msra.mxu0 0.0
    %164 = vmatprep.subr.mxu0 0.0
    %165 = vmatpush1.msra.mxu0 0.0
    %166 = vmatprep.subr.mxu0 0.0
    %167 = vmatpush1.msra.mxu0 0.0
    %168 = vmatprep.mubr.f32.mxu0 0.0
    %169 = vmatmul.mubr.f32.gmra.mrb[0].mxu0 %v80
    %v170 = vpop.f32.mrb[0].mxu0
    %v171 = vadd.f32 %v102, %v170
    %v172 = vpop.f32.mrb[0].mxu0
    %173 = vdwg.mxu0
    %v174 = vtanh.pop %v171
    %v175 = vld [vmem:[#allocation7] sm:$0xff]
    %v176 = vld [vmem:[#allocation7 + $0x8] sm:$0xff]
    %v177 = vld [vmem:[#allocation7 + $0x10] sm:$0xff]
    %v178 = vld [vmem:[#allocation7 + $0x18] sm:$0xff]
    %v179 = vld [vmem:[#allocation7 + $0x20] sm:$0xff]
    %v180 = vld [vmem:[#allocation7 + $0x28] sm:$0xff]
    %v181 = vld [vmem:[#allocation7 + $0x30] sm:$0xff]
    %v182 = vld [vmem:[#allocation7 + $0x38] sm:$0xff]
    %v183 = vld [vmem:[#allocation7 + $0x40] sm:$0xff]
    %v184 = vld [vmem:[#allocation7 + $0x48] sm:$0xff]
    %v185 = vld [vmem:[#allocation7 + $0x50] sm:$0xff]
    %v186 = vld [vmem:[#allocation7 + $0x58] sm:$0xff]
    %v187 = vld [vmem:[#allocation7 + $0x60] sm:$0xff]
    %v188 = vld [vmem:[#allocation7 + $0x68] sm:$0xff]
    %v189 = vld [vmem:[#allocation7 + $0x70] sm:$0xff]
    %v190 = vld [vmem:[#allocation7 + $0x78] sm:$0xff]
    %v191 = vld [vmem:[%s4] sm:$0x1]
    %v193 = vlaneseq
    %v194 = vshrl.u32 %v193, 7
    %v195 = vsub.s32 0, %v194
    %v196 = vrot.slane %v191, %v195
    %198 = vmatprep.subr.mxu0 0.0
    %199 = vmatpush1.msra.mxu0 %v175
    %200 = vmatprep.subr.mxu0 0.0
    %201 = vmatpush1.msra.mxu0 %v176
    %202 = vmatprep.subr.mxu0 0.0
    %203 = vmatpush1.msra.mxu0 %v177
    %204 = vmatprep.subr.mxu0 0.0
    %205 = vmatpush1.msra.mxu0 %v178
    %206 = vmatprep.subr.mxu0 0.0
    %207 = vmatpush1.msra.mxu0 %v179
    %208 = vmatprep.subr.mxu0 0.0
    %209 = vmatpush1.msra.mxu0 %v180
    %210 = vmatprep.subr.mxu0 0.0
    %211 = vmatpush1.msra.mxu0 %v181
    %212 = vmatprep.subr.mxu0 0.0
    %213 = vmatpush1.msra.mxu0 %v182
    %214 = vmatprep.subr.mxu0 0.0
    %215 = vmatpush1.msra.mxu0 %v183
    %216 = vmatprep.subr.mxu0 0.0
    %217 = vmatpush1.msra.mxu0 %v184
    %218 = vmatprep.subr.mxu0 0.0
    %219 = vmatpush1.msra.mxu0 %v185
    %220 = vmatprep.subr.mxu0 0.0
    %221 = vmatpush1.msra.mxu0 %v186
    %222 = vmatprep.subr.mxu0 0.0
    %223 = vmatpush1.msra.mxu0 %v187
    %224 = vmatprep.subr.mxu0 0.0
    %225 = vmatpush1.msra.mxu0 %v188
    %226 = vmatprep.subr.mxu0 0.0
    %227 = vmatpush1.msra.mxu0 %v189
    %228 = vmatprep.subr.mxu0 0.0
    %229 = vmatpush1.msra.mxu0 %v190
    %230 = vmatprep.subr.mxu0 0.0
    %231 = vmatpush1.msra.mxu0 0.0
    %232 = vmatprep.subr.mxu0 0.0
    %233 = vmatpush1.msra.mxu0 0.0
    %234 = vmatprep.subr.mxu0 0.0
    %235 = vmatpush1.msra.mxu0 0.0
    %236 = vmatprep.subr.mxu0 0.0
    %237 = vmatpush1.msra.mxu0 0.0
    %238 = vmatprep.subr.mxu0 0.0
    %239 = vmatpush1.msra.mxu0 0.0
    %240 = vmatprep.subr.mxu0 0.0
    %241 = vmatpush1.msra.mxu0 0.0
    %242 = vmatprep.subr.mxu0 0.0
    %243 = vmatpush1.msra.mxu0 0.0
    %244 = vmatprep.subr.mxu0 0.0
    %245 = vmatpush1.msra.mxu0 0.0
    %246 = vmatprep.subr.mxu0 0.0
    %247 = vmatpush1.msra.mxu0 0.0
    %248 = vmatprep.subr.mxu0 0.0
    %249 = vmatpush1.msra.mxu0 0.0
    %250 = vmatprep.subr.mxu0 0.0
    %251 = vmatpush1.msra.mxu0 0.0
    %252 = vmatprep.subr.mxu0 0.0
    %253 = vmatpush1.msra.mxu0 0.0
    %254 = vmatprep.subr.mxu0 0.0
    %255 = vmatpush1.msra.mxu0 0.0
    %256 = vmatprep.subr.mxu0 0.0
    %257 = vmatpush1.msra.mxu0 0.0
    %258 = vmatprep.subr.mxu0 0.0
    %259 = vmatpush1.msra.mxu0 0.0
    %260 = vmatprep.subr.mxu0 0.0
    %261 = vmatpush1.msra.mxu0 0.0
    %262 = vmatprep.mubr.f32.mxu0 0.0
    %263 = vmatmul.mubr.f32.gmra.mrb[0].mxu0 %v174
    %v264 = vpop.f32.mrb[0].mxu0
    %v265 = vadd.f32 %v196, %v264
    %v266 = vpop.f32.mrb[0].mxu0
    %267 = vdwg.mxu0
    %v268 = vtanh.pop %v265
    %v269 = vld [vmem:[#allocation8] sm:$0xff]
    %v270 = vld [vmem:[#allocation8 + $0x8] sm:$0xff]
    %v271 = vld [vmem:[#allocation8 + $0x10] sm:$0xff]
    %v272 = vld [vmem:[#allocation8 + $0x18] sm:$0xff]
    %v273 = vld [vmem:[#allocation8 + $0x20] sm:$0xff]
    %v274 = vld [vmem:[#allocation8 + $0x28] sm:$0xff]
    %v275 = vld [vmem:[#allocation8 + $0x30] sm:$0xff]
    %v276 = vld [vmem:[#allocation8 + $0x38] sm:$0xff]
    %v277 = vld [vmem:[#allocation8 + $0x40] sm:$0xff]
    %v278 = vld [vmem:[#allocation8 + $0x48] sm:$0xff]
    %v279 = vld [vmem:[#allocation8 + $0x50] sm:$0xff]
    %v280 = vld [vmem:[#allocation8 + $0x58] sm:$0xff]
    %v281 = vld [vmem:[#allocation8 + $0x60] sm:$0xff]
    %v282 = vld [vmem:[#allocation8 + $0x68] sm:$0xff]
    %v283 = vld [vmem:[#allocation8 + $0x70] sm:$0xff]
    %v284 = vld [vmem:[#allocation8 + $0x78] sm:$0xff]
    %v285 = vld [vmem:[%s6] sm:$0x1]
    %v287 = vlaneseq
    %v288 = vshrl.u32 %v287, 7
    %v289 = vsub.s32 0, %v288
    %v290 = vrot.slane %v285, %v289
    %292 = vmatprep.subr.mxu0 0.0
    %293 = vmatpush1.msra.mxu0 %v269
    %294 = vmatprep.subr.mxu0 0.0
    %295 = vmatpush1.msra.mxu0 %v270
    %296 = vmatprep.subr.mxu0 0.0
    %297 = vmatpush1.msra.mxu0 %v271
    %298 = vmatprep.subr.mxu0 0.0
    %299 = vmatpush1.msra.mxu0 %v272
    %300 = vmatprep.subr.mxu0 0.0
    %301 = vmatpush1.msra.mxu0 %v273
    %302 = vmatprep.subr.mxu0 0.0
    %303 = vmatpush1.msra.mxu0 %v274
    %304 = vmatprep.subr.mxu0 0.0
    %305 = vmatpush1.msra.mxu0 %v275
    %306 = vmatprep.subr.mxu0 0.0
    %307 = vmatpush1.msra.mxu0 %v276
    %308 = vmatprep.subr.mxu0 0.0
    %309 = vmatpush1.msra.mxu0 %v277
    %310 = vmatprep.subr.mxu0 0.0
    %311 = vmatpush1.msra.mxu0 %v278
    %312 = vmatprep.subr.mxu0 0.0
    %313 = vmatpush1.msra.mxu0 %v279
    %314 = vmatprep.subr.mxu0 0.0
    %315 = vmatpush1.msra.mxu0 %v280
    %316 = vmatprep.subr.mxu0 0.0
    %317 = vmatpush1.msra.mxu0 %v281
    %318 = vmatprep.subr.mxu0 0.0
    %319 = vmatpush1.msra.mxu0 %v282
    %320 = vmatprep.subr.mxu0 0.0
    %321 = vmatpush1.msra.mxu0 %v283
    %322 = vmatprep.subr.mxu0 0.0
    %323 = vmatpush1.msra.mxu0 %v284
    %324 = vmatprep.subr.mxu0 0.0
    %325 = vmatpush1.msra.mxu0 0.0
    %326 = vmatprep.subr.mxu0 0.0
    %327 = vmatpush1.msra.mxu0 0.0
    %328 = vmatprep.subr.mxu0 0.0
    %329 = vmatpush1.msra.mxu0 0.0
    %330 = vmatprep.subr.mxu0 0.0
    %331 = vmatpush1.msra.mxu0 0.0
    %332 = vmatprep.subr.mxu0 0.0
    %333 = vmatpush1.msra.mxu0 0.0
    %334 = vmatprep.subr.mxu0 0.0
    %335 = vmatpush1.msra.mxu0 0.0
    %336 = vmatprep.subr.mxu0 0.0
    %337 = vmatpush1.msra.mxu0 0.0
    %338 = vmatprep.subr.mxu0 0.0
    %339 = vmatpush1.msra.mxu0 0.0
    %340 = vmatprep.subr.mxu0 0.0
    %341 = vmatpush1.msra.mxu0 0.0
    %342 = vmatprep.subr.mxu0 0.0
    %343 = vmatpush1.msra.mxu0 0.0
    %344 = vmatprep.subr.mxu0 0.0
    %345 = vmatpush1.msra.mxu0 0.0
    %346 = vmatprep.subr.mxu0 0.0
    %347 = vmatpush1.msra.mxu0 0.0
    %348 = vmatprep.subr.mxu0 0.0
    %349 = vmatpush1.msra.mxu0 0.0
    %350 = vmatprep.subr.mxu0 0.0
    %351 = vmatpush1.msra.mxu0 0.0
    %352 = vmatprep.subr.mxu0 0.0
    %353 = vmatpush1.msra.mxu0 0.0
    %354 = vmatprep.subr.mxu0 0.0
    %355 = vmatpush1.msra.mxu0 0.0
    %356 = vmatprep.mubr.f32.mxu0 0.0
    %357 = vmatmul.mubr.f32.gmra.mrb[0].mxu0 %v268
    %v358 = vpop.f32.mrb[0].mxu0
    %v359 = vadd.f32 %v290, %v358
    %v360 = vpop.f32.mrb[0].mxu0
    %361 = vdwg.mxu0
    %362 = vst [vmem:[#allocation10] sm:$0xff] %v359
    // Predicated region
    $region46: #{tpu_custom_call.1} parent=1 // pred_check
      _
    $region47: #{tpu_custom_call.1} parent=1 // pred_check_branch
      %364 = sbr.rel (0) target = $region49
    $region48: #{tpu_custom_call.1} parent=1 // pred_region
      %s366 = ssub.s32 128, 128
      %367 = vsyncadd [#allocation4], %s366
      %s369 = sshll.u32 [#allocation10], 4
      %s370 = int_to_ptr.vmem [resolvable:$true] %s369
      %372 = dma.vmem_to_hbm [thread:$0]  %s370, 128, %s7, [#allocation4]
    $region49: #{tpu_custom_call.1} parent=1 // pred_fallthru
      _
    // Predicated region
    $region50: #{tpu_custom_call.1} parent=1 // pred_check
      _
    $region51: #{tpu_custom_call.1} parent=1 // pred_check_branch
      %374 = sbr.rel (0) target = $region53
    $region52: #{tpu_custom_call.1} parent=1 // pred_region
      %375 = dma.done [#allocation4], 128
    $region53: #{tpu_custom_call.1} parent=1 // pred_fallthru
      _
    %376 = vsyncpa [#allocation3], 1
    %377 = vsyncpa [#allocation6], 1
    %378 = vsyncpa [#allocation9], 1
    %379 = vsyncpa [#allocation4], 1

</llo_original>
